<compile_context>
chip_gen: v7x
topology: tpu7x:2x2x1
jax: 0.10.0
libtpu: 0.0.40
codegen_flags: <defaults>
</compile_context>

<pallas_src>
import jax
import jax.numpy as jnp
from jax.experimental import pallas as pl
from jax.experimental.pallas import tpu as pltpu


def _round_up(n, m):
    return (n + m - 1) // m * m


def _make_kernel(hw, hw_tile, needs_mask):
    def kernel(x_ref, omax_ref, osum_ref):
        k = pl.program_id(1)

        @pl.when(k == 0)
        def _init():
            omax_ref[...] = jnp.full_like(omax_ref, -jnp.inf)
            osum_ref[...] = jnp.zeros_like(osum_ref)

        # (row_tile, hw_tile); accumulate in f32 regardless of input dtype.
        x = x_ref[...].astype(jnp.float32)

        if needs_mask:
            # Mask padded tail lanes with -inf for the max path only
            # (zero padding is already neutral for the sum path).
            col = k * hw_tile + jax.lax.broadcasted_iota(jnp.int32, x.shape, 1)
            x_for_max = jnp.where(col < hw, x, -jnp.inf)
        else:
            x_for_max = x

        omax_ref[...] = jnp.maximum(
            omax_ref[...], jnp.max(x_for_max, axis=-1)[None, None, :])
        osum_ref[...] = osum_ref[...] + jnp.sum(x, axis=-1)[None, None, :]

        @pl.when(k == pl.num_programs(1) - 1)
        def _finalize():
            osum_ref[...] = osum_ref[...] * (1.0 / hw)  # sum -> mean (true divisor)

    return kernel


def max_avg_pool(x, *, row_tile=256, hw_tile=2048):
    """x: (B, C, H, W) -> (B, 2*C): [max-pooled channels, avg-pooled channels]."""
    B, C, H, W = x.shape
    rows = B * C
    hw = H * W

    R = min(row_tile, _round_up(rows, 8))    # sublane-aligned row tile
    T = min(hw_tile, _round_up(hw, 128))     # lane-aligned reduction tile
    rows_pad = _round_up(rows, R)
    hw_pad = _round_up(hw, T)

    x2 = x.reshape(rows, hw)
    if rows_pad != rows or hw_pad != hw:
        x2 = jnp.pad(x2, ((0, rows_pad - rows), (0, hw_pad - hw)))

    n_row_tiles = rows_pad // R
    n_hw_tiles = hw_pad // T

    kernel = _make_kernel(hw, T, hw_pad != hw)
    out_struct = jax.ShapeDtypeStruct((n_row_tiles, 1, R), jnp.float32)
    out_spec = pl.BlockSpec((1, 1, R), lambda i, k: (i, 0, 0))

    omax, omean = pl.pallas_call(
        kernel,
        out_shape=(out_struct, out_struct),
        grid_spec=pltpu.PrefetchScalarGridSpec(
            num_scalar_prefetch=0,
            grid=(n_row_tiles, n_hw_tiles),
            in_specs=[pl.BlockSpec((R, T), lambda i, k: (i, k))],
            out_specs=(out_spec, out_spec),
        ),
        compiler_params=pltpu.CompilerParams(
            dimension_semantics=("parallel", "arbitrary")),
    )(x2)

    omax = omax.reshape(rows_pad)[:rows].reshape(B, C)
    omean = omean.reshape(rows_pad)[:rows].reshape(B, C)
    return jnp.concatenate([omax, omean], axis=1).astype(x.dtype)


def _reference(x):
    return jnp.concatenate(
        [jnp.max(x, axis=(2, 3)), jnp.mean(x, axis=(2, 3))], axis=1)


if __name__ == "__main__":
    key = jax.random.PRNGKey(0)

    # Primary check: the module's small test shape.
    B, C, H, W = 2, 4, 16, 16
    x = jax.random.normal(key, (B, C, H, W), dtype=jnp.float32)
    out = max_avg_pool(x)
    jax.block_until_ready(out)
    assert out.shape == (B, 2 * C), out.shape
    assert jnp.allclose(out, _reference(x), atol=1e-5, rtol=1e-5), "mismatch (primary)"

    # Secondary check: ragged H*W + forced small tiles -> exercises zero padding,
    # the -inf tail mask, multiple row tiles, and accumulation across HW tiles.
    k2 = jax.random.PRNGKey(1)
    B2, C2, H2, W2 = 2, 12, 9, 17
    x_r = jax.random.normal(k2, (B2, C2, H2, W2), dtype=jnp.float32)
    out2 = max_avg_pool(x_r, row_tile=8, hw_tile=128)
    jax.block_until_ready(out2)
    assert out2.shape == (B2, 2 * C2), out2.shape
    assert jnp.allclose(out2, _reference(x_r), atol=1e-5, rtol=1e-5), "mismatch (ragged)"

    print("KERNEL_OK")
</pallas_src>

<mosaic_0001>
module attributes {stable_mosaic.version = 11 : i64} {
  func.func @kernel(%arg0: i32, %arg1: i32, %arg2: memref<8x256xf32, #tpu.memory_space<vmem>>, %arg3: memref<1x1x8xf32, #tpu.memory_space<vmem>>, %arg4: memref<1x1x8xf32, #tpu.memory_space<vmem>>) attributes {dimension_semantics = [#tpu.dimension_semantics<parallel>, #tpu.dimension_semantics<arbitrary>], iteration_bounds = array<i64: 1, 1>, scalar_prefetch = 0 : i64, scratch_operands = 0 : i64, tpu.core_type = #tpu.core_type<tc>, window_params = [{transform_indices = @transform_0, window_bounds = array<i64: 8, 256>}, {transform_indices = @transform_1, window_bounds = array<i64: 1, 1, 8>}, {transform_indices = @transform_2, window_bounds = array<i64: 1, 1, 8>}]} {
    %c0_i32 = arith.constant 0 : i32
    %0 = arith.cmpi eq, %arg1, %c0_i32 : i32
    %1 = arith.extui %0 : i1 to i32
    %c0_i32_0 = arith.constant 0 : i32
    %2 = arith.cmpi ne, %1, %c0_i32_0 : i32
    scf.if %2 {
      %cst_17 = arith.constant 0xFF800000 : f32
      %17 = vector.broadcast %cst_17 : f32 to vector<1x1x8xf32>
      %c0_18 = arith.constant 0 : index
      %c0_19 = arith.constant 0 : index
      %c0_20 = arith.constant 0 : index
      %18 = vector.load %arg3[%c0_18, %c0_19, %c0_20] : memref<1x1x8xf32, #tpu.memory_space<vmem>>, vector<1x1x8xf32>
      tpu.vector_store %arg3[%c0_18, %c0_19, %c0_20], %17 {strides = array<i32>} : memref<1x1x8xf32, #tpu.memory_space<vmem>>, vector<1x1x8xf32>,
      %cst_21 = arith.constant 0.000000e+00 : f32
      %19 = vector.broadcast %cst_21 : f32 to vector<1x1x8xf32>
      %c0_22 = arith.constant 0 : index
      %c0_23 = arith.constant 0 : index
      %c0_24 = arith.constant 0 : index
      %20 = vector.load %arg4[%c0_22, %c0_23, %c0_24] : memref<1x1x8xf32, #tpu.memory_space<vmem>>, vector<1x1x8xf32>
      tpu.vector_store %arg4[%c0_22, %c0_23, %c0_24], %19 {strides = array<i32>} : memref<1x1x8xf32, #tpu.memory_space<vmem>>, vector<1x1x8xf32>,
    } else {
    }
    %c0 = arith.constant 0 : index
    %c0_1 = arith.constant 0 : index
    %3 = vector.load %arg2[%c0, %c0_1] : memref<8x256xf32, #tpu.memory_space<vmem>>, vector<8x256xf32>
    %c0_2 = arith.constant 0 : index
    %c0_3 = arith.constant 0 : index
    %c0_4 = arith.constant 0 : index
    %4 = vector.load %arg3[%c0_2, %c0_3, %c0_4] : memref<1x1x8xf32, #tpu.memory_space<vmem>>, vector<1x1x8xf32>
    %cst = arith.constant dense<0xFF800000> : vector<8xf32>
    %5 = vector.multi_reduction <maximumf>, %3, %cst [1] : vector<8x256xf32> to vector<8xf32>
    %6 = vector.shape_cast %5 : vector<8xf32> to vector<1x1x8xf32>
    %7 = arith.maximumf %4, %6 : vector<1x1x8xf32>
    %c0_5 = arith.constant 0 : index
    %c0_6 = arith.constant 0 : index
    %c0_7 = arith.constant 0 : index
    %8 = vector.load %arg3[%c0_5, %c0_6, %c0_7] : memref<1x1x8xf32, #tpu.memory_space<vmem>>, vector<1x1x8xf32>
    tpu.vector_store %arg3[%c0_5, %c0_6, %c0_7], %7 {strides = array<i32>} : memref<1x1x8xf32, #tpu.memory_space<vmem>>, vector<1x1x8xf32>,
    %c0_8 = arith.constant 0 : index
    %c0_9 = arith.constant 0 : index
    %c0_10 = arith.constant 0 : index
    %9 = vector.load %arg4[%c0_8, %c0_9, %c0_10] : memref<1x1x8xf32, #tpu.memory_space<vmem>>, vector<1x1x8xf32>
    %cst_11 = arith.constant dense<0.000000e+00> : vector<8xf32>
    %10 = vector.multi_reduction <add>, %3, %cst_11 [1] : vector<8x256xf32> to vector<8xf32>
    %11 = vector.shape_cast %10 : vector<8xf32> to vector<1x1x8xf32>
    %12 = arith.addf %9, %11 : vector<1x1x8xf32>
    %c0_12 = arith.constant 0 : index
    %c0_13 = arith.constant 0 : index
    %c0_14 = arith.constant 0 : index
    %13 = vector.load %arg4[%c0_12, %c0_13, %c0_14] : memref<1x1x8xf32, #tpu.memory_space<vmem>>, vector<1x1x8xf32>
    tpu.vector_store %arg4[%c0_12, %c0_13, %c0_14], %12 {strides = array<i32>} : memref<1x1x8xf32, #tpu.memory_space<vmem>>, vector<1x1x8xf32>,
    %c0_i32_15 = arith.constant 0 : i32
    %14 = arith.cmpi eq, %arg1, %c0_i32_15 : i32
    %15 = arith.extui %14 : i1 to i32
    %c0_i32_16 = arith.constant 0 : i32
    %16 = arith.cmpi ne, %15, %c0_i32_16 : i32
    scf.if %16 {
      %c0_17 = arith.constant 0 : index
      %c0_18 = arith.constant 0 : index
      %c0_19 = arith.constant 0 : index
      %17 = vector.load %arg4[%c0_17, %c0_18, %c0_19] : memref<1x1x8xf32, #tpu.memory_space<vmem>>, vector<1x1x8xf32>
      %cst_20 = arith.constant 3.906250e-03 : f32
      %18 = vector.broadcast %cst_20 : f32 to vector<1x1x8xf32>
      %19 = arith.mulf %17, %18 : vector<1x1x8xf32>
      %c0_21 = arith.constant 0 : index
      %c0_22 = arith.constant 0 : index
      %c0_23 = arith.constant 0 : index
      %20 = vector.load %arg4[%c0_21, %c0_22, %c0_23] : memref<1x1x8xf32, #tpu.memory_space<vmem>>, vector<1x1x8xf32>
      tpu.vector_store %arg4[%c0_21, %c0_22, %c0_23], %19 {strides = array<i32>} : memref<1x1x8xf32, #tpu.memory_space<vmem>>, vector<1x1x8xf32>,
    } else {
    }
    return
  }
  func.func @transform_0(%arg0: i32, %arg1: i32) -> (i32, i32) {
    %c0_i32 = arith.constant 0 : i32
    return %arg0, %arg1 : i32, i32
  }
  func.func @transform_1(%arg0: i32, %arg1: i32) -> (i32, i32, i32) {
    %c0_i32 = arith.constant 0 : i32
    %c0_i32_0 = arith.constant 0 : i32
    %c0_i32_1 = arith.constant 0 : i32
    return %arg0, %c0_i32, %c0_i32_0 : i32, i32, i32
  }
  func.func @transform_2(%arg0: i32, %arg1: i32) -> (i32, i32, i32) {
    %c0_i32 = arith.constant 0 : i32
    %c0_i32_0 = arith.constant 0 : i32
    %c0_i32_1 = arith.constant 0 : i32
    return %arg0, %c0_i32, %c0_i32_0 : i32, i32, i32
  }
}

</mosaic_0001>

<llo_original>
// kernel: tpu_custom_call.1
$region0: #{tpu_custom_call.1}
  #allocation0 [shape = 'u32[]', space=smem, size = 0x4, offset = 0x4, fixed_abs, tag = 'smem constant byte address 0x4 - core index']
  #allocation1 [shape = 'u32[144,128]{1,0:T(1,128)}', space=vmem, size = 0x12000, scoped, tag = 'internal scratch']
  %s0 = inlined_call_operand.hbm [shape: f32[8,256], index: 0, kind: input, shape index: {}]
  %s1 = inlined_call_operand.hbm [shape: f32[1,1,8], index: 1, kind: output, shape index: {0}]
  %s2 = inlined_call_operand.hbm [shape: f32[1,1,8], index: 2, kind: output, shape index: {1}]
  %3 = xla_tuple %s1, %s2
  %s4 = sld [smem:[#allocation0]]
  $region34: #{tpu_custom_call.1} parent=0
    _
  %s6 = ssub.s32 1, %s4
  %s7 = scalar_select 0, %s6, %s4
  $region1: #{tpu_custom_call.1} parent=0
    #allocation2 [shape = 'u8[8192]{0}', space=vmem, size = 0x2000, scoped, tag = 'input window, operand 0, single buffered']
    #allocation3 [shape = 's32[1]{0}', space=sflag, size = 0x4, scoped, tag = 'scoped memory for tpu_custom_call.1']
    #allocation4 [shape = 's32[1]{0}', space=sflag, size = 0x4, scoped, tag = 'scoped memory for tpu_custom_call.1']
    #allocation5 [shape = 'u8[512]{0}', space=vmem, size = 0x400, scoped, tag = 'output window, operand 0, single buffered']
    #allocation6 [shape = 'u8[512]{0}', space=vmem, size = 0x400, scoped, tag = 'output window, operand 1, single buffered']
    #allocation7 [shape = 's32[1]{0}', space=sflag, size = 0x4, scoped, tag = 'scoped memory for tpu_custom_call.1']
    %8 = vsyncpa [#allocation3], 0
    %9 = vsyncpa [#allocation4], 0
    %10 = vsyncpa [#allocation7], 0
    // Predicated region
    $region2: #{tpu_custom_call.1} parent=1 // pred_check
      _
    $region3: #{tpu_custom_call.1} parent=1 // pred_check_branch
      %12 = sbr.rel (0) target = $region5
    $region4: #{tpu_custom_call.1} parent=1 // pred_region
      %s14 = ssub.s32 256, 256
      %15 = vsyncadd [#allocation3], %s14
      %s17 = sshll.u32 [#allocation2], 4
      %s18 = int_to_ptr.vmem [resolvable:$true] %s17
      %20 = dma.hbm_to_vmem [thread:$0]  %s0, 256, %s18, [#allocation3]
    $region5: #{tpu_custom_call.1} parent=1 // pred_fallthru
      _
    // Predicated region
    $region6: #{tpu_custom_call.1} parent=1 // pred_check
      _
    $region7: #{tpu_custom_call.1} parent=1 // pred_check_branch
      %22 = sbr.rel (0) target = $region9
    $region8: #{tpu_custom_call.1} parent=1 // pred_region
      %23 = dma.done [#allocation3], 256
    $region9: #{tpu_custom_call.1} parent=1 // pred_fallthru
      _
    %p24 = scmp.eq.s32.totalorder 0, 0
    // Predicated region
    $region10: #{tpu_custom_call.1} parent=1 // pred_check
      %p25 = pneg %p24
    $region11: #{tpu_custom_call.1} parent=1 // pred_check_branch
      %27 = sbr.rel (%p25) target = $region13
    $region12: #{tpu_custom_call.1} parent=1 // pred_region
      %vm28 = vcmask 57344
      %29 = vst.msk [vmem:[#allocation5] sm:$0x1] %vm28, -inf
      %30 = vst.msk [vmem:[#allocation6] sm:$0x1] %vm28, 0.0
    $region13: #{tpu_custom_call.1} parent=1 // pred_fallthru
      _
    %v31 = vld [vmem:[#allocation2] sm:$0xff]
    %v32 = vld [vmem:[#allocation2 + $0x8] sm:$0xff]
    %v33 = vld [vmem:[#allocation5] sm:$0x1]
    %v34 = vmax.f32 %v31, %v32
    %35 = vmax.xlane.f32.xlu0 %v34
    %v36 = vpop.xlane.xlu0 %35
    %v38 = vlaneseq
    %v39 = vshrl.u32 %v38, 7
    %v40 = vsub.s32 0, %v39
    %v41 = vrot.slane %v36, %v40
    %v42 = vlaneseq
    %v43 = vshrl.u32 %v42, 7
    %v44 = vsub.s32 1, %v43
    %v45 = vrot.slane %v36, %v44
    %v46 = vlaneseq
    %v47 = vshrl.u32 %v46, 7
    %v48 = vsub.s32 2, %v47
    %v49 = vrot.slane %v36, %v48
    %v50 = vlaneseq
    %v51 = vshrl.u32 %v50, 7
    %v52 = vsub.s32 3, %v51
    %v53 = vrot.slane %v36, %v52
    %v54 = vlaneseq
    %v55 = vshrl.u32 %v54, 7
    %v56 = vsub.s32 4, %v55
    %v57 = vrot.slane %v36, %v56
    %v58 = vlaneseq
    %v59 = vshrl.u32 %v58, 7
    %v60 = vsub.s32 5, %v59
    %v61 = vrot.slane %v36, %v60
    %v62 = vlaneseq
    %v63 = vshrl.u32 %v62, 7
    %v64 = vsub.s32 6, %v63
    %v65 = vrot.slane %v36, %v64
    %v66 = vlaneseq
    %v67 = vshrl.u32 %v66, 7
    %v68 = vsub.s32 7, %v67
    %v69 = vrot.slane %v36, %v68
    %v70 = vcombine.low %v41, %v45
    %v71 = vcombine.low %v49, %v53
    %v72 = vcombine.low %v57, %v61
    %v73 = vcombine.low %v65, %v69
    %v75 = vunpack.c.l.s4 1966171168
    %v76 = vunpack.c.0.s8 %v75
    %v77 = vlaneseq
    %v78 = vshrl.u32 %v77, 7
    %v79 = vsub.s32 %v76, %v78
    %v80 = vrot.slane %v70, %v79
    %v82 = vunpack.c.l.s4 1966171168
    %v83 = vunpack.c.0.s8 %v82
    %v84 = vlaneseq
    %v85 = vshrl.u32 %v84, 7
    %v86 = vsub.s32 %v83, %v85
    %v87 = vrot.slane %v71, %v86
    %v89 = vunpack.c.l.s4 1966171168
    %v90 = vunpack.c.0.s8 %v89
    %v91 = vlaneseq
    %v92 = vshrl.u32 %v91, 7
    %v93 = vsub.s32 %v90, %v92
    %v94 = vrot.slane %v72, %v93
    %v96 = vunpack.c.l.s4 1966171168
    %v97 = vunpack.c.0.s8 %v96
    %v98 = vlaneseq
    %v99 = vshrl.u32 %v98, 7
    %v100 = vsub.s32 %v97, %v99
    %v101 = vrot.slane %v73, %v100
    %v102 = vcombine.low %v80, %v87
    %v103 = vcombine.low %v94, %v101
    %v105 = vunpack.c.l.s4 1966171168
    %v106 = vunpack.c.0.s8 %v105
    %v107 = vlaneseq
    %v108 = vshrl.u32 %v107, 7
    %v109 = vsub.s32 %v106, %v108
    %v110 = vrot.slane %v102, %v109
    %v112 = vunpack.c.l.s4 1966171168
    %v113 = vunpack.c.0.s8 %v112
    %v114 = vlaneseq
    %v115 = vshrl.u32 %v114, 7
    %v116 = vsub.s32 %v113, %v115
    %v117 = vrot.slane %v103, %v116
    %v118 = vcombine.low %v110, %v117
    %119 = vset.pattern.permute.xlu0 0
    %120 = vperm.xlu0 %119, %v118
    %v121 = vpop.permute.xlu0 %120
    %v122 = vlaneseq
    %v123 = vand.u32 %v122, 127
    %v124 = vlaneseq
    %v125 = vshrl.u32 %v124, 7
    %v126 = vsub.s32 %v123, %v125
    %v127 = vrot.slane %v121, %v126
    %v129 = vunpack.c.l.s4 1966171168
    %v130 = vunpack.c.0.s8 %v129
    %v131 = vlaneseq
    %v132 = vshrl.u32 %v131, 7
    %v133 = vsub.s32 %v130, %v132
    %v134 = vrot.slane %v127, %v133
    %v136 = vunpack.c.l.s4 1966171168
    %v137 = vunpack.c.0.s8 %v136
    %v138 = vlaneseq
    %v139 = vshrl.u32 %v138, 7
    %v140 = vsub.s32 %v137, %v139
    %v141 = vrot.slane %v134, %v140
    %v143 = vmax.f32 %v33, %v141
    %vm144 = vcmask 57344
    %145 = vst.msk [vmem:[#allocation5] sm:$0x1] %vm144, %v143
    %v146 = vld [vmem:[#allocation6] sm:$0x1]
    %v147 = vadd.f32 %v31, %v32
    %148 = vadd.xlane.f32.xlu0 %v147
    %v149 = vpop.xlane.xlu0 %148
    %v151 = vlaneseq
    %v152 = vshrl.u32 %v151, 7
    %v153 = vsub.s32 0, %v152
    %v154 = vrot.slane %v149, %v153
    %v155 = vlaneseq
    %v156 = vshrl.u32 %v155, 7
    %v157 = vsub.s32 1, %v156
    %v158 = vrot.slane %v149, %v157
    %v159 = vlaneseq
    %v160 = vshrl.u32 %v159, 7
    %v161 = vsub.s32 2, %v160
    %v162 = vrot.slane %v149, %v161
    %v163 = vlaneseq
    %v164 = vshrl.u32 %v163, 7
    %v165 = vsub.s32 3, %v164
    %v166 = vrot.slane %v149, %v165
    %v167 = vlaneseq
    %v168 = vshrl.u32 %v167, 7
    %v169 = vsub.s32 4, %v168
    %v170 = vrot.slane %v149, %v169
    %v171 = vlaneseq
    %v172 = vshrl.u32 %v171, 7
    %v173 = vsub.s32 5, %v172
    %v174 = vrot.slane %v149, %v173
    %v175 = vlaneseq
    %v176 = vshrl.u32 %v175, 7
    %v177 = vsub.s32 6, %v176
    %v178 = vrot.slane %v149, %v177
    %v179 = vlaneseq
    %v180 = vshrl.u32 %v179, 7
    %v181 = vsub.s32 7, %v180
    %v182 = vrot.slane %v149, %v181
    %v183 = vcombine.low %v154, %v158
    %v184 = vcombine.low %v162, %v166
    %v185 = vcombine.low %v170, %v174
    %v186 = vcombine.low %v178, %v182
    %v188 = vunpack.c.l.s4 1966171168
    %v189 = vunpack.c.0.s8 %v188
    %v190 = vlaneseq
    %v191 = vshrl.u32 %v190, 7
    %v192 = vsub.s32 %v189, %v191
    %v193 = vrot.slane %v183, %v192
    %v195 = vunpack.c.l.s4 1966171168
    %v196 = vunpack.c.0.s8 %v195
    %v197 = vlaneseq
    %v198 = vshrl.u32 %v197, 7
    %v199 = vsub.s32 %v196, %v198
    %v200 = vrot.slane %v184, %v199
    %v202 = vunpack.c.l.s4 1966171168
    %v203 = vunpack.c.0.s8 %v202
    %v204 = vlaneseq
    %v205 = vshrl.u32 %v204, 7
    %v206 = vsub.s32 %v203, %v205
    %v207 = vrot.slane %v185, %v206
    %v209 = vunpack.c.l.s4 1966171168
    %v210 = vunpack.c.0.s8 %v209
    %v211 = vlaneseq
    %v212 = vshrl.u32 %v211, 7
    %v213 = vsub.s32 %v210, %v212
    %v214 = vrot.slane %v186, %v213
    %v215 = vcombine.low %v193, %v200
    %v216 = vcombine.low %v207, %v214
    %v218 = vunpack.c.l.s4 1966171168
    %v219 = vunpack.c.0.s8 %v218
    %v220 = vlaneseq
    %v221 = vshrl.u32 %v220, 7
    %v222 = vsub.s32 %v219, %v221
    %v223 = vrot.slane %v215, %v222
    %v225 = vunpack.c.l.s4 1966171168
    %v226 = vunpack.c.0.s8 %v225
    %v227 = vlaneseq
    %v228 = vshrl.u32 %v227, 7
    %v229 = vsub.s32 %v226, %v228
    %v230 = vrot.slane %v216, %v229
    %v231 = vcombine.low %v223, %v230
    %232 = vset.pattern.permute.xlu0 0
    %233 = vperm.xlu0 %232, %v231
    %v234 = vpop.permute.xlu0 %233
    %v235 = vlaneseq
    %v236 = vshrl.u32 %v235, 7
    %v237 = vsub.s32 %v123, %v236
    %v238 = vrot.slane %v234, %v237
    %v240 = vunpack.c.l.s4 1966171168
    %v241 = vunpack.c.0.s8 %v240
    %v242 = vlaneseq
    %v243 = vshrl.u32 %v242, 7
    %v244 = vsub.s32 %v241, %v243
    %v245 = vrot.slane %v238, %v244
    %v247 = vunpack.c.l.s4 1966171168
    %v248 = vunpack.c.0.s8 %v247
    %v249 = vlaneseq
    %v250 = vshrl.u32 %v249, 7
    %v251 = vsub.s32 %v248, %v250
    %v252 = vrot.slane %v245, %v251
    %v254 = vadd.f32 %v146, %v252
    %255 = vst.msk [vmem:[#allocation6] sm:$0x1] %vm144, %v254
    // Predicated region
    $region14: #{tpu_custom_call.1} parent=1 // pred_check
      %p256 = pneg %p24
    $region15: #{tpu_custom_call.1} parent=1 // pred_check_branch
      %258 = sbr.rel (%p256) target = $region17
    $region16: #{tpu_custom_call.1} parent=1 // pred_region
      %v259 = vld [vmem:[#allocation6] sm:$0x1]
      %v260 = vmul.f32 %v259, 0.00390625
      %261 = vst.msk [vmem:[#allocation6] sm:$0x1] %vm144, %v260
    $region17: #{tpu_custom_call.1} parent=1 // pred_fallthru
      _
    // Predicated region
    $region18: #{tpu_custom_call.1} parent=1 // pred_check
      _
    $region19: #{tpu_custom_call.1} parent=1 // pred_check_branch
      %263 = sbr.rel (0) target = $region21
    $region20: #{tpu_custom_call.1} parent=1 // pred_region
      %s265 = ssub.s32 16, 16
      %266 = vsyncadd [#allocation4], %s265
      %s268 = sshll.u32 [#allocation5], 4
      %s269 = int_to_ptr.vmem [resolvable:$true] %s268
      %271 = dma.vmem_to_hbm [thread:$0]  %s269, 16, %s1, [#allocation4]
    $region21: #{tpu_custom_call.1} parent=1 // pred_fallthru
      _
    // Predicated region
    $region22: #{tpu_custom_call.1} parent=1 // pred_check
      _
    $region23: #{tpu_custom_call.1} parent=1 // pred_check_branch
      %273 = sbr.rel (0) target = $region25
    $region24: #{tpu_custom_call.1} parent=1 // pred_region
      %s275 = ssub.s32 16, 16
      %276 = vsyncadd [#allocation7], %s275
      %s278 = sshll.u32 [#allocation6], 4
      %s279 = int_to_ptr.vmem [resolvable:$true] %s278
      %281 = dma.vmem_to_hbm [thread:$0]  %s279, 16, %s2, [#allocation7]
    $region25: #{tpu_custom_call.1} parent=1 // pred_fallthru
      _
    // Predicated region
    $region26: #{tpu_custom_call.1} parent=1 // pred_check
      _
    $region27: #{tpu_custom_call.1} parent=1 // pred_check_branch
      %283 = sbr.rel (0) target = $region29
    $region28: #{tpu_custom_call.1} parent=1 // pred_region
      %284 = dma.done [#allocation4], 16
    $region29: #{tpu_custom_call.1} parent=1 // pred_fallthru
      _
    // Predicated region
    $region30: #{tpu_custom_call.1} parent=1 // pred_check
      _
    $region31: #{tpu_custom_call.1} parent=1 // pred_check_branch
      %286 = sbr.rel (0) target = $region33
    $region32: #{tpu_custom_call.1} parent=1 // pred_region
      %287 = dma.done [#allocation7], 16
    $region33: #{tpu_custom_call.1} parent=1 // pred_fallthru
      _
    %288 = vsyncpa [#allocation3], 1
    %289 = vsyncpa [#allocation4], 1
    %290 = vsyncpa [#allocation7], 1

</llo_original>
